<compile_context>
chip_gen: v5e
topology: v5e:2x2
jax: 0.10.0
libtpu: 0.0.40
codegen_flags: <defaults>
</compile_context>

<pallas_src>
import jax
import jax.numpy as jnp
from jax import lax
from jax.experimental import pallas as pl
from jax.experimental.pallas import tpu as pltpu

_BN_EPS = 1e-5


def _round_up(x, m):
    return ((x + m - 1) // m) * m


# --------------------------------------------------------------------------- #
# Kernel: per batch-block MLP.  BN + embedding are pre-folded into w_eff/b_eff.
# --------------------------------------------------------------------------- #
def discriminator_kernel(click_ref, xflat_ref, w1c_ref, weff_ref, b1_ref,
                         w2_ref, b2_ref, w3_ref, b3_ref, out_ref):
    # Streamed activations only need an f32 -> bf16 cast (BN affine is in w_eff).
    x = xflat_ref[...].astype(jnp.bfloat16)        # (TB, R*F)
    clk = click_ref[...].astype(jnp.bfloat16)      # (TB, R)

    # hidden layer 1: click part + (BN + embedding + Linear) folded K=R*F matmul
    h1 = (jnp.dot(clk, w1c_ref[...], preferred_element_type=jnp.float32)
          + jnp.dot(x, weff_ref[...], preferred_element_type=jnp.float32)
          + b1_ref[...])
    h1 = jnp.maximum(h1, 0.0).astype(jnp.bfloat16)          # fn() == ReLU

    h2 = jnp.dot(h1, w2_ref[...], preferred_element_type=jnp.float32) + b2_ref[...]
    h2 = jnp.maximum(h2, 0.0).astype(jnp.bfloat16)

    # lane-dense (padded to 128) bf16 output store
    out_ref[...] = (jnp.dot(h2, w3_ref[...], preferred_element_type=jnp.float32)
                    + b3_ref[...]).astype(out_ref.dtype)


# --------------------------------------------------------------------------- #
# One-time (per parameter set) weight preparation -- keep out of the hot path.
# --------------------------------------------------------------------------- #
def prepare_params(params, rank_cut):
    R = rank_cut
    F, E = params["we"].shape
    H = params["w1"].shape[1]
    O = params["w3"].shape[1]
    OPAD = _round_up(O, 128)                                 # lane-dense width

    # fold the embedding Linear into the first MLP layer (weight-only algebra)
    w1c = params["w1"][:R, :]                                # (R, H) click columns
    w1e = params["w1"][R:, :].reshape(R, E, H)               # per-rank embed cols
    wfold = jnp.einsum("fe,reh->rfh", params["we"], w1e).reshape(R * F, H)
    b1_eff = params["b1"] + params["be"] @ jnp.sum(w1e, axis=0)       # (1, H)

    # lane-dense last layer: zero-pad O up to a multiple of 128
    w3p = jnp.zeros((H, OPAD), jnp.float32).at[:, :O].set(params["w3"])
    b3p = jnp.zeros((1, OPAD), jnp.float32).at[:, :O].set(params["b3"])

    return {
        "gamma": params["gamma"][0], "beta": params["beta"][0],   # (F,)
        "w1c": w1c.astype(jnp.bfloat16),
        "wfold": wfold,                    # f32: scaled per call (BN), then bf16
        "b1_eff": b1_eff,                  # (1, H) f32
        "w2": params["w2"].astype(jnp.bfloat16), "b2": params["b2"],
        "w3p": w3p.astype(jnp.bfloat16), "b3p": b3p,
    }


# --------------------------------------------------------------------------- #
# Forward
# --------------------------------------------------------------------------- #
def discriminator_forward(click_logs, rankings, prep, output_size):
    """click_logs: (B, R) f32, rankings: (B, R, F) f32 -> (B, output_size) f32."""
    B, R = click_logs.shape
    F = rankings.shape[-1]
    RF = R * F
    H = prep["w2"].shape[0]
    OPAD = prep["w3p"].shape[1]

    # single, transpose-free view passed to the kernel (rankings read once there)
    xflat = rankings.reshape(B, RF)

    # BatchNorm1d training-mode statistics over all B*R rows (biased variance),
    # shifted single pass for numerical stability (one XLA reduction over rankings)
    x2 = rankings.reshape(B * R, F)
    c = x2[0]
    d = x2 - c
    md = jnp.mean(d, axis=0)
    vd = jnp.mean(d * d, axis=0)
    mean = c + md
    var = vd - md * md
    scale = prep["gamma"] * lax.rsqrt(var + _BN_EPS)          # (F,)
    shift = prep["beta"] - mean * scale                       # (F,)

    # fold the BN affine into the (embedding-folded) first-layer weights
    w_eff = (prep["wfold"] * jnp.tile(scale, R)[:, None]).astype(jnp.bfloat16)
    b_eff = prep["b1_eff"] + jnp.tile(shift, R)[None, :] @ prep["wfold"]   # (1, H)

    # batch tiling: multiple of 8, capped at 256 rows per block
    TB = min(256, _round_up(B, 8))
    Bp = _round_up(B, TB)
    if Bp != B:
        click_p = jnp.zeros((Bp, R), click_logs.dtype).at[:B].set(click_logs)
        xflat_p = jnp.zeros((Bp, RF), xflat.dtype).at[:B].set(xflat)
    else:
        click_p, xflat_p = click_logs, xflat

    out = pl.pallas_call(
        discriminator_kernel,
        out_shape=jax.ShapeDtypeStruct((Bp, OPAD), jnp.bfloat16),
        grid=(Bp // TB,),
        in_specs=[
            pl.BlockSpec((TB, R), lambda i: (i, 0)),      # click  (streamed)
            pl.BlockSpec((TB, RF), lambda i: (i, 0)),     # xflat  (streamed)
            pl.BlockSpec((R, H), lambda i: (0, 0)),       # w1c    (resident)
            pl.BlockSpec((RF, H), lambda i: (0, 0)),      # w_eff  (resident)
            pl.BlockSpec((1, H), lambda i: (0, 0)),       # b_eff
            pl.BlockSpec((H, H), lambda i: (0, 0)),       # w2
            pl.BlockSpec((1, H), lambda i: (0, 0)),       # b2
            pl.BlockSpec((H, OPAD), lambda i: (0, 0)),    # w3 (padded)
            pl.BlockSpec((1, OPAD), lambda i: (0, 0)),    # b3 (padded)
        ],
        out_specs=pl.BlockSpec((TB, OPAD), lambda i: (i, 0)),
        compiler_params=pltpu.CompilerParams(
            dimension_semantics=("parallel",)),           # v7x: shard across TCs
    )(click_p, xflat_p, prep["w1c"], w_eff, b_eff,
      prep["w2"], prep["b2"], prep["w3p"], prep["b3p"])

    return out[:B, :output_size].astype(jnp.float32)


# --------------------------------------------------------------------------- #
# Pure-JAX f32 mirror of the torch forward (un-folded weights)
# --------------------------------------------------------------------------- #
def reference_forward(click_logs, rankings, params):
    B, R, F = rankings.shape
    x = rankings.reshape(-1, F)
    mean = x.mean(axis=0)
    var = ((x - mean) ** 2).mean(axis=0)
    norm = (x - mean) / jnp.sqrt(var + _BN_EPS) * params["gamma"][0] + params["beta"][0]
    norm = norm.reshape(B, R, F)
    emb = norm @ params["we"] + params["be"][0]
    data = jnp.concatenate([click_logs, emb.reshape(B, -1)], axis=1)
    h = jnp.maximum(data @ params["w1"] + params["b1"][0], 0.0)
    h = jnp.maximum(h @ params["w2"] + params["b2"][0], 0.0)
    return h @ params["w3"] + params["b3"][0]


def init_params(key, feature_size, embed_size, rank_cut, hidden_size, output_size):
    input_size = rank_cut * embed_size + rank_cut
    ks = jax.random.split(key, 8)

    def linear(kw, kb, fan_in, fan_out):
        bound = 1.0 / jnp.sqrt(fan_in)
        w = jax.random.uniform(kw, (fan_in, fan_out), jnp.float32, -bound, bound)
        b = jax.random.uniform(kb, (1, fan_out), jnp.float32, -bound, bound)
        return w, b

    we, be = linear(ks[0], ks[1], feature_size, embed_size)
    w1, b1 = linear(ks[2], ks[3], input_size, hidden_size)
    w2, b2 = linear(ks[4], ks[5], hidden_size, hidden_size)
    w3, b3 = linear(ks[6], ks[7], hidden_size, output_size)
    return {
        "gamma": jnp.ones((1, feature_size), jnp.float32),   # BatchNorm1d defaults
        "beta": jnp.zeros((1, feature_size), jnp.float32),
        "we": we, "be": be,
        "w1": w1, "b1": b1,
        "w2": w2, "b2": b2,
        "w3": w3, "b3": b3,
    }


if __name__ == "__main__":
    # Small, forward-consistent shapes
    B, rank_cut, feature_size, embed_size = 4, 8, 32, 8
    hidden_size, output_size = 32, 1

    key = jax.random.PRNGKey(0)
    k_params, k_click, k_rank = jax.random.split(key, 3)

    params = init_params(k_params, feature_size, embed_size,
                         rank_cut, hidden_size, output_size)

    click_logs = jax.random.bernoulli(
        k_click, 0.3, (B, rank_cut)).astype(jnp.float32)
    rankings = jax.random.normal(
        k_rank, (B, rank_cut, feature_size), jnp.float32)

    # one-time weight preparation (outside the per-call hot path)
    prep = prepare_params(params, rank_cut)

    fwd = jax.jit(discriminator_forward, static_argnames="output_size")
    out = fwd(click_logs, rankings, prep, output_size=output_size)
    out = jax.block_until_ready(out)

    ref = reference_forward(click_logs, rankings, params)
    assert out.shape == (B, output_size)
    # bf16 MXU operands / bf16 output store (f32 accumulation) -> loose tolerance
    assert jnp.allclose(out, ref, atol=3e-2, rtol=3e-2), (out, ref)

    print("KERNEL_OK")
</pallas_src>

<mosaic_0001>
module attributes {stable_mosaic.version = 11 : i64} {
  func.func @discriminator_kernel(%arg0: i32, %arg1: memref<8x8xf32, #tpu.memory_space<vmem>>, %arg2: memref<8x256xf32, #tpu.memory_space<vmem>>, %arg3: memref<8x32xbf16, #tpu.memory_space<vmem>>, %arg4: memref<256x32xbf16, #tpu.memory_space<vmem>>, %arg5: memref<1x32xf32, #tpu.memory_space<vmem>>, %arg6: memref<32x32xbf16, #tpu.memory_space<vmem>>, %arg7: memref<1x32xf32, #tpu.memory_space<vmem>>, %arg8: memref<32x128xbf16, #tpu.memory_space<vmem>>, %arg9: memref<1x128xf32, #tpu.memory_space<vmem>>, %arg10: memref<8x128xbf16, #tpu.memory_space<vmem>>) attributes {dimension_semantics = [#tpu.dimension_semantics<parallel>], iteration_bounds = array<i64: 1>, scalar_prefetch = 0 : i64, scratch_operands = 0 : i64, tpu.core_type = #tpu.core_type<tc>, window_params = [{transform_indices = @transform_0, window_bounds = array<i64: 8, 8>}, {transform_indices = @transform_1, window_bounds = array<i64: 8, 256>}, {pipeline_mode = #tpu.pipeline_mode<synchronous>, transform_indices = @transform_2, window_bounds = array<i64: 8, 32>}, {pipeline_mode = #tpu.pipeline_mode<synchronous>, transform_indices = @transform_3, window_bounds = array<i64: 256, 32>}, {pipeline_mode = #tpu.pipeline_mode<synchronous>, transform_indices = @transform_4, window_bounds = array<i64: 1, 32>}, {pipeline_mode = #tpu.pipeline_mode<synchronous>, transform_indices = @transform_5, window_bounds = array<i64: 32, 32>}, {pipeline_mode = #tpu.pipeline_mode<synchronous>, transform_indices = @transform_6, window_bounds = array<i64: 1, 32>}, {pipeline_mode = #tpu.pipeline_mode<synchronous>, transform_indices = @transform_7, window_bounds = array<i64: 32, 128>}, {pipeline_mode = #tpu.pipeline_mode<synchronous>, transform_indices = @transform_8, window_bounds = array<i64: 1, 128>}, {transform_indices = @transform_9, window_bounds = array<i64: 8, 128>}]} {
    %c0 = arith.constant 0 : index
    %c0_0 = arith.constant 0 : index
    %0 = vector.load %arg2[%c0, %c0_0] : memref<8x256xf32, #tpu.memory_space<vmem>>, vector<8x256xf32>
    %1 = arith.truncf %0 : vector<8x256xf32> to vector<8x256xbf16>
    %c0_1 = arith.constant 0 : index
    %c0_2 = arith.constant 0 : index
    %2 = vector.load %arg1[%c0_1, %c0_2] : memref<8x8xf32, #tpu.memory_space<vmem>>, vector<8x8xf32>
    %3 = arith.truncf %2 : vector<8x8xf32> to vector<8x8xbf16>
    %c0_3 = arith.constant 0 : index
    %c0_4 = arith.constant 0 : index
    %4 = vector.load %arg3[%c0_3, %c0_4] : memref<8x32xbf16, #tpu.memory_space<vmem>>, vector<8x32xbf16>
    %cst = arith.constant dense<0.000000e+00> : vector<8x32xf32>
    %5 = tpu.matmul %3, %4, %cst {dimension_numbers = #tpu.dot_dimension_numbers<[1], [0], [0], [1], [0, 0, 1, 1], [], []>} : vector<8x8xbf16>, vector<8x32xbf16>, vector<8x32xf32> -> vector<8x32xf32>
    %c0_5 = arith.constant 0 : index
    %c0_6 = arith.constant 0 : index
    %6 = vector.load %arg4[%c0_5, %c0_6] : memref<256x32xbf16, #tpu.memory_space<vmem>>, vector<256x32xbf16>
    %cst_7 = arith.constant dense<0.000000e+00> : vector<8x32xf32>
    %7 = tpu.matmul %1, %6, %cst_7 {dimension_numbers = #tpu.dot_dimension_numbers<[1], [0], [0], [1], [0, 0, 1, 1], [], []>} : vector<8x256xbf16>, vector<256x32xbf16>, vector<8x32xf32> -> vector<8x32xf32>
    %8 = arith.addf %5, %7 : vector<8x32xf32>
    %c0_8 = arith.constant 0 : index
    %c0_9 = arith.constant 0 : index
    %9 = vector.load %arg5[%c0_8, %c0_9] : memref<1x32xf32, #tpu.memory_space<vmem>>, vector<1x32xf32>
    %10 = vector.broadcast %9 : vector<1x32xf32> to vector<8x32xf32>
    %11 = arith.addf %8, %10 : vector<8x32xf32>
    %cst_10 = arith.constant 0.000000e+00 : f32
    %12 = vector.broadcast %cst_10 : f32 to vector<8x32xf32>
    %13 = arith.maximumf %11, %12 : vector<8x32xf32>
    %14 = arith.truncf %13 : vector<8x32xf32> to vector<8x32xbf16>
    %c0_11 = arith.constant 0 : index
    %c0_12 = arith.constant 0 : index
    %15 = vector.load %arg6[%c0_11, %c0_12] : memref<32x32xbf16, #tpu.memory_space<vmem>>, vector<32x32xbf16>
    %cst_13 = arith.constant dense<0.000000e+00> : vector<8x32xf32>
    %16 = tpu.matmul %14, %15, %cst_13 {dimension_numbers = #tpu.dot_dimension_numbers<[1], [0], [0], [1], [0, 0, 1, 1], [], []>} : vector<8x32xbf16>, vector<32x32xbf16>, vector<8x32xf32> -> vector<8x32xf32>
    %c0_14 = arith.constant 0 : index
    %c0_15 = arith.constant 0 : index
    %17 = vector.load %arg7[%c0_14, %c0_15] : memref<1x32xf32, #tpu.memory_space<vmem>>, vector<1x32xf32>
    %18 = vector.broadcast %17 : vector<1x32xf32> to vector<8x32xf32>
    %19 = arith.addf %16, %18 : vector<8x32xf32>
    %cst_16 = arith.constant 0.000000e+00 : f32
    %20 = vector.broadcast %cst_16 : f32 to vector<8x32xf32>
    %21 = arith.maximumf %19, %20 : vector<8x32xf32>
    %22 = arith.truncf %21 : vector<8x32xf32> to vector<8x32xbf16>
    %c0_17 = arith.constant 0 : index
    %c0_18 = arith.constant 0 : index
    %23 = vector.load %arg8[%c0_17, %c0_18] : memref<32x128xbf16, #tpu.memory_space<vmem>>, vector<32x128xbf16>
    %cst_19 = arith.constant dense<0.000000e+00> : vector<8x128xf32>
    %24 = tpu.matmul %22, %23, %cst_19 {dimension_numbers = #tpu.dot_dimension_numbers<[1], [0], [0], [1], [0, 0, 1, 1], [], []>} : vector<8x32xbf16>, vector<32x128xbf16>, vector<8x128xf32> -> vector<8x128xf32>
    %c0_20 = arith.constant 0 : index
    %c0_21 = arith.constant 0 : index
    %25 = vector.load %arg9[%c0_20, %c0_21] : memref<1x128xf32, #tpu.memory_space<vmem>>, vector<1x128xf32>
    %26 = vector.broadcast %25 : vector<1x128xf32> to vector<8x128xf32>
    %27 = arith.addf %24, %26 : vector<8x128xf32>
    %28 = arith.truncf %27 : vector<8x128xf32> to vector<8x128xbf16>
    %c0_22 = arith.constant 0 : index
    %c0_23 = arith.constant 0 : index
    %29 = vector.load %arg10[%c0_22, %c0_23] : memref<8x128xbf16, #tpu.memory_space<vmem>>, vector<8x128xbf16>
    tpu.vector_store %arg10[%c0_22, %c0_23], %28 {strides = array<i32>} : memref<8x128xbf16, #tpu.memory_space<vmem>>, vector<8x128xbf16>,
    return
  }
  func.func @transform_0(%arg0: i32) -> (i32, i32) {
    %c0_i32 = arith.constant 0 : i32
    %c0_i32_0 = arith.constant 0 : i32
    return %arg0, %c0_i32 : i32, i32
  }
  func.func @transform_1(%arg0: i32) -> (i32, i32) {
    %c0_i32 = arith.constant 0 : i32
    %c0_i32_0 = arith.constant 0 : i32
    return %arg0, %c0_i32 : i32, i32
  }
  func.func @transform_2(%arg0: i32) -> (i32, i32) {
    %c0_i32 = arith.constant 0 : i32
    %c0_i32_0 = arith.constant 0 : i32
    %c0_i32_1 = arith.constant 0 : i32
    return %c0_i32, %c0_i32_0 : i32, i32
  }
  func.func @transform_3(%arg0: i32) -> (i32, i32) {
    %c0_i32 = arith.constant 0 : i32
    %c0_i32_0 = arith.constant 0 : i32
    %c0_i32_1 = arith.constant 0 : i32
    return %c0_i32, %c0_i32_0 : i32, i32
  }
  func.func @transform_4(%arg0: i32) -> (i32, i32) {
    %c0_i32 = arith.constant 0 : i32
    %c0_i32_0 = arith.constant 0 : i32
    %c0_i32_1 = arith.constant 0 : i32
    return %c0_i32, %c0_i32_0 : i32, i32
  }
  func.func @transform_5(%arg0: i32) -> (i32, i32) {
    %c0_i32 = arith.constant 0 : i32
    %c0_i32_0 = arith.constant 0 : i32
    %c0_i32_1 = arith.constant 0 : i32
    return %c0_i32, %c0_i32_0 : i32, i32
  }
  func.func @transform_6(%arg0: i32) -> (i32, i32) {
    %c0_i32 = arith.constant 0 : i32
    %c0_i32_0 = arith.constant 0 : i32
    %c0_i32_1 = arith.constant 0 : i32
    return %c0_i32, %c0_i32_0 : i32, i32
  }
  func.func @transform_7(%arg0: i32) -> (i32, i32) {
    %c0_i32 = arith.constant 0 : i32
    %c0_i32_0 = arith.constant 0 : i32
    %c0_i32_1 = arith.constant 0 : i32
    return %c0_i32, %c0_i32_0 : i32, i32
  }
  func.func @transform_8(%arg0: i32) -> (i32, i32) {
    %c0_i32 = arith.constant 0 : i32
    %c0_i32_0 = arith.constant 0 : i32
    %c0_i32_1 = arith.constant 0 : i32
    return %c0_i32, %c0_i32_0 : i32, i32
  }
  func.func @transform_9(%arg0: i32) -> (i32, i32) {
    %c0_i32 = arith.constant 0 : i32
    %c0_i32_0 = arith.constant 0 : i32
    return %arg0, %c0_i32 : i32, i32
  }
}

</mosaic_0001>

<llo_original>
// kernel: tile.13
$region0: #{tile.13}
  #allocation0 [shape = 's32[1]{0}', space=sflag, size = 0x4, scoped, tag = 'scoped memory for tile.13']
  %s0 = inlined_call_operand.vmem [shape: f32[32], index: 0, kind: input, shape index: {}]
  %s1 = inlined_call_operand.vmem [shape: f32[8,32], index: 1, kind: output, shape index: {}]
  // Predicated region
  $region2: #{tile.13} parent=0 // pred_check
    _
  $region3: #{tile.13} parent=0 // pred_check_branch
    %3 = sbr.rel (0) target = $region5
  $region4: #{tile.13} parent=0 // pred_region
    _
  $region5: #{tile.13} parent=0 // pred_fallthru
    _
  %v4 = vld [vmem:[%s0] ss:$0 sm:$0xff]
  %5 = vst [vmem:[%s1] sm:$0xff] %v4

// kernel: mul.13
$region0: #{mul.13}
  %s0 = inlined_call_operand.vmem [shape: f32[8,32], index: 0, kind: input, shape index: {}]
  %s1 = inlined_call_operand.vmem [shape: f32[256], index: 1, kind: output, shape index: {}]
  $region1: #{mul.13} parent=0
    #allocation0 [shape = 'u8[4096]{0}', space=vmem, size = 0x1000, scoped, tag = 'scoped mem for output reshape']
    %s2 = smov 3
    %v3 = vld [vmem:[%s0] ss:$4 sm:%s2]
    %vm4 = vcmask 261120
    %5 = vst.msk [vmem:[#allocation0] sm:$0x3] %vm4, %v3
    %s6 = scalar_lea.vmem %s0, 3
    %s7 = smov 3
    %v8 = vld [vmem:[%s6] ss:$4 sm:%s7]
    %9 = vrot.lane.b32.xlu0 %v8, 96
    %v10 = vpop.permute.xlu0 %9
    %vm11 = vcmask 1048320
    %12 = vst.msk [vmem:[#allocation0] sm:$0x3] %vm11, %v10
    %s13 = scalar_lea.vmem %s0, 2
    %s14 = smov 3
    %v15 = vld [vmem:[%s13] ss:$4 sm:%s14]
    %16 = vrot.lane.b32.xlu0 %v15, 64
    %v17 = vpop.permute.xlu0 %16
    %vm18 = vcmask 785920
    %19 = vst.msk [vmem:[#allocation0] sm:$0x3] %vm18, %v17
    %s20 = scalar_lea.vmem %s0, 1
    %s21 = smov 3
    %v22 = vld [vmem:[%s20] ss:$4 sm:%s21]
    %23 = vrot.lane.b32.xlu0 %v22, 32
    %v24 = vpop.permute.xlu0 %23
    %vm25 = vcmask 523520
    %26 = vst.msk [vmem:[#allocation0] sm:$0x3] %vm25, %v24
    %s28 = ssub.s32 4, 1
    %v29 = vld [vmem:[#allocation0] sm:%s28]
    %s31 = ssub.s32 4, 1
    %32 = vst [vmem:[%s1] sm:%s31] %v29

// kernel: discriminator_forward.1
$region0: #{discriminator_forward.1}
  #allocation0 [shape = 'u32[]', space=smem, size = 0x4, offset = 0x4, fixed_abs, tag = 'smem constant byte address 0x4 - core index']
  #allocation1 [shape = 'u32[72,128]{1,0:T(1,128)}', space=vmem, size = 0x9000, scoped, tag = 'internal scratch']
  %s0 = inlined_call_operand.vmem [shape: f32[8,8], index: 0, kind: input, shape index: {}]
  %s1 = inlined_call_operand.vmem [shape: f32[8,256], index: 1, kind: input, shape index: {}]
  %s2 = inlined_call_operand.vmem [shape: bf16[8,32], index: 2, kind: input, shape index: {}]
  %s3 = inlined_call_operand.vmem [shape: bf16[256,32], index: 3, kind: input, shape index: {}]
  %s4 = inlined_call_operand.vmem [shape: f32[1,32], index: 4, kind: input, shape index: {}]
  %s5 = inlined_call_operand.vmem [shape: bf16[32,32], index: 5, kind: input, shape index: {}]
  %s6 = inlined_call_operand.vmem [shape: f32[1,32], index: 6, kind: input, shape index: {}]
  %s7 = inlined_call_operand.vmem [shape: bf16[32,128], index: 7, kind: input, shape index: {}]
  %s8 = inlined_call_operand.vmem [shape: f32[1,128], index: 8, kind: input, shape index: {}]
  %s9 = inlined_call_operand.vmem [shape: bf16[8,128], index: 9, kind: output, shape index: {}]
  %s10 = sld [smem:[#allocation0]]
  $region46: #{discriminator_forward.1} parent=0
    _
  %s12 = ssub.s32 1, %s10
  %s13 = scalar_select 0, %s12, %s10
  // Predicated region
  $region2: #{discriminator_forward.1} parent=0 // pred_check
    _
  $region3: #{discriminator_forward.1} parent=0 // pred_check_branch
    %15 = sbr.rel (0) target = $region5
  $region4: #{discriminator_forward.1} parent=0 // pred_region
    _
  $region5: #{discriminator_forward.1} parent=0 // pred_fallthru
    _
  // Predicated region
  $region6: #{discriminator_forward.1} parent=0 // pred_check
    _
  $region7: #{discriminator_forward.1} parent=0 // pred_check_branch
    %17 = sbr.rel (0) target = $region9
  $region8: #{discriminator_forward.1} parent=0 // pred_region
    _
  $region9: #{discriminator_forward.1} parent=0 // pred_fallthru
    _
  // Predicated region
  $region10: #{discriminator_forward.1} parent=0 // pred_check
    _
  $region11: #{discriminator_forward.1} parent=0 // pred_check_branch
    %19 = sbr.rel (0) target = $region13
  $region12: #{discriminator_forward.1} parent=0 // pred_region
    _
  $region13: #{discriminator_forward.1} parent=0 // pred_fallthru
    _
  // Predicated region
  $region14: #{discriminator_forward.1} parent=0 // pred_check
    _
  $region15: #{discriminator_forward.1} parent=0 // pred_check_branch
    %21 = sbr.rel (0) target = $region17
  $region16: #{discriminator_forward.1} parent=0 // pred_region
    _
  $region17: #{discriminator_forward.1} parent=0 // pred_fallthru
    _
  // Predicated region
  $region18: #{discriminator_forward.1} parent=0 // pred_check
    _
  $region19: #{discriminator_forward.1} parent=0 // pred_check_branch
    %23 = sbr.rel (0) target = $region21
  $region20: #{discriminator_forward.1} parent=0 // pred_region
    _
  $region21: #{discriminator_forward.1} parent=0 // pred_fallthru
    _
  // Predicated region
  $region22: #{discriminator_forward.1} parent=0 // pred_check
    _
  $region23: #{discriminator_forward.1} parent=0 // pred_check_branch
    %25 = sbr.rel (0) target = $region25
  $region24: #{discriminator_forward.1} parent=0 // pred_region
    _
  $region25: #{discriminator_forward.1} parent=0 // pred_fallthru
    _
  // Predicated region
  $region26: #{discriminator_forward.1} parent=0 // pred_check
    _
  $region27: #{discriminator_forward.1} parent=0 // pred_check_branch
    %27 = sbr.rel (0) target = $region29
  $region28: #{discriminator_forward.1} parent=0 // pred_region
    _
  $region29: #{discriminator_forward.1} parent=0 // pred_fallthru
    _
  // Predicated region
  $region30: #{discriminator_forward.1} parent=0 // pred_check
    _
  $region31: #{discriminator_forward.1} parent=0 // pred_check_branch
    %29 = sbr.rel (0) target = $region33
  $region32: #{discriminator_forward.1} parent=0 // pred_region
    _
  $region33: #{discriminator_forward.1} parent=0 // pred_fallthru
    _
  // Predicated region
  $region34: #{discriminator_forward.1} parent=0 // pred_check
    _
  $region35: #{discriminator_forward.1} parent=0 // pred_check_branch
    %31 = sbr.rel (0) target = $region37
  $region36: #{discriminator_forward.1} parent=0 // pred_region
    _
  $region37: #{discriminator_forward.1} parent=0 // pred_fallthru
    _
  %v33 = vld [vmem:[%s1] sm:$0xff]
  %v34 = vld [vmem:[%s1 + $0x8] sm:$0xff]
  %v35 = vpack.c.bf16 %v33, %v33
  %v36 = vpack.c.bf16 %v34, %v34
  %v37 = vld [vmem:[%s0] sm:$0xff]
  %v38 = vpack.c.bf16 %v37, %v37
  %v39 = vld [vmem:[%s2] sm:$0xf]
  %v40 = vld [vmem:[%s3] sm:$0xf]
  %v41 = vld [vmem:[%s3 + $0x4] sm:$0xf]
  %v42 = vld [vmem:[%s3 + $0x8] sm:$0xf]
  %v43 = vld [vmem:[%s3 + $0xc] sm:$0xf]
  %v44 = vld [vmem:[%s3 + $0x10] sm:$0xf]
  %v45 = vld [vmem:[%s3 + $0x14] sm:$0xf]
  %v46 = vld [vmem:[%s3 + $0x18] sm:$0xf]
  %v47 = vld [vmem:[%s3 + $0x1c] sm:$0xf]
  %v48 = vld [vmem:[%s3 + $0x20] sm:$0xf]
  %v49 = vld [vmem:[%s3 + $0x24] sm:$0xf]
  %v50 = vld [vmem:[%s3 + $0x28] sm:$0xf]
  %v51 = vld [vmem:[%s3 + $0x2c] sm:$0xf]
  %v52 = vld [vmem:[%s3 + $0x30] sm:$0xf]
  %v53 = vld [vmem:[%s3 + $0x34] sm:$0xf]
  %v54 = vld [vmem:[%s3 + $0x38] sm:$0xf]
  %v55 = vld [vmem:[%s3 + $0x3c] sm:$0xf]
  %v56 = vld [vmem:[%s3 + $0x40] sm:$0xf]
  %v57 = vld [vmem:[%s3 + $0x44] sm:$0xf]
  %v58 = vld [vmem:[%s3 + $0x48] sm:$0xf]
  %v59 = vld [vmem:[%s3 + $0x4c] sm:$0xf]
  %v60 = vld [vmem:[%s3 + $0x50] sm:$0xf]
  %v61 = vld [vmem:[%s3 + $0x54] sm:$0xf]
  %v62 = vld [vmem:[%s3 + $0x58] sm:$0xf]
  %v63 = vld [vmem:[%s3 + $0x5c] sm:$0xf]
  %v64 = vld [vmem:[%s3 + $0x60] sm:$0xf]
  %v65 = vld [vmem:[%s3 + $0x64] sm:$0xf]
  %v66 = vld [vmem:[%s3 + $0x68] sm:$0xf]
  %v67 = vld [vmem:[%s3 + $0x6c] sm:$0xf]
  %v68 = vld [vmem:[%s3 + $0x70] sm:$0xf]
  %v69 = vld [vmem:[%s3 + $0x74] sm:$0xf]
  %v70 = vld [vmem:[%s3 + $0x78] sm:$0xf]
  %v71 = vld [vmem:[%s3 + $0x7c] sm:$0xf]
  %v104 = vunpack.c.l.b16 %v40
  %v105 = vunpack.c.l.b16 %v41
  %v106 = vunpack.c.l.b16 %v42
  %v107 = vunpack.c.l.b16 %v43
  %v108 = vunpack.c.l.b16 %v44
  %v109 = vunpack.c.l.b16 %v45
  %v110 = vunpack.c.l.b16 %v46
  %v111 = vunpack.c.l.b16 %v47
  %v112 = vunpack.c.l.b16 %v48
  %v113 = vunpack.c.l.b16 %v49
  %v114 = vunpack.c.l.b16 %v50
  %v115 = vunpack.c.l.b16 %v51
  %v116 = vunpack.c.l.b16 %v52
  %v117 = vunpack.c.l.b16 %v53
  %v118 = vunpack.c.l.b16 %v54
  %v119 = vunpack.c.l.b16 %v55
  %v120 = vunpack.c.l.b16 %v56
  %v121 = vunpack.c.l.b16 %v57
  %v122 = vunpack.c.l.b16 %v58
  %v123 = vunpack.c.l.b16 %v59
  %v124 = vunpack.c.l.b16 %v60
  %v125 = vunpack.c.l.b16 %v61
  %v126 = vunpack.c.l.b16 %v62
  %v127 = vunpack.c.l.b16 %v63
  %v128 = vunpack.c.l.b16 %v64
  %v129 = vunpack.c.l.b16 %v65
  %v130 = vunpack.c.l.b16 %v66
  %v131 = vunpack.c.l.b16 %v67
  %v132 = vunpack.c.l.b16 %v68
  %v133 = vunpack.c.l.b16 %v69
  %v134 = vunpack.c.l.b16 %v70
  %v135 = vunpack.c.l.b16 %v71
  %v136 = vpack.c.b16 %v105, %v104
  %v137 = vpack.c.b16 %v107, %v106
  %v138 = vpack.c.b16 %v109, %v108
  %v139 = vpack.c.b16 %v111, %v110
  %v140 = vpack.c.b16 %v113, %v112
  %v141 = vpack.c.b16 %v115, %v114
  %v142 = vpack.c.b16 %v117, %v116
  %v143 = vpack.c.b16 %v119, %v118
  %v144 = vpack.c.b16 %v121, %v120
  %v145 = vpack.c.b16 %v123, %v122
  %v146 = vpack.c.b16 %v125, %v124
  %v147 = vpack.c.b16 %v127, %v126
  %v148 = vpack.c.b16 %v129, %v128
  %v149 = vpack.c.b16 %v131, %v130
  %v150 = vpack.c.b16 %v133, %v132
  %v151 = vpack.c.b16 %v135, %v134
  %168 = vmatpush.bf16.msra.mxu0 %v143
  %169 = vmatpush.bf16.msra.mxu0 %v142
  %170 = vmatpush.bf16.msra.mxu0 %v141
  %171 = vmatpush.bf16.msra.mxu0 %v140
  %172 = vmatpush.bf16.msra.mxu0 %v139
  %173 = vmatpush.bf16.msra.mxu0 %v138
  %174 = vmatpush.bf16.msra.mxu0 %v137
  %175 = vmatpush.bf16.msra.mxu0 %v136
  %176 = vmatmul.bf16.gmra.mxu0 %v35
  %v177 = vpop.f32.mrf.mxu0
  %v178 = vadd.f32 0.0, %v177
  %v179 = vpop.f32.mrf.mxu0
  %180 = vdwg.mxu0
  %181 = vmatpush.bf16.msra.mxu0 %v151
  %182 = vmatpush.bf16.msra.mxu0 %v150
  %183 = vmatpush.bf16.msra.mxu0 %v149
  %184 = vmatpush.bf16.msra.mxu0 %v148
  %185 = vmatpush.bf16.msra.mxu0 %v147
  %186 = vmatpush.bf16.msra.mxu0 %v146
  %187 = vmatpush.bf16.msra.mxu0 %v145
  %188 = vmatpush.bf16.msra.mxu0 %v144
  %189 = vmatmul.bf16.gmra.mxu0 %v36
  %v190 = vpop.f32.mrf.mxu0
  %v191 = vadd.f32 %v178, %v190
  %v192 = vpop.f32.mrf.mxu0
  %193 = vdwg.mxu0
  %vm194 = vcmask 64512
  %v196 = vsel %vm194, %v38, 0
  %vm198 = vcmask 1043456
  %v200 = vsel %vm198, %v39, 0
  %202 = vmatpush.bf16.msra.mxu0 0
  %203 = vmatpush.bf16.msra.mxu0 0
  %204 = vmatpush.bf16.msra.mxu0 0
  %205 = vmatpush.bf16.msra.mxu0 0
  %206 = vmatpush.bf16.msra.mxu0 0
  %207 = vmatpush.bf16.msra.mxu0 0
  %208 = vmatpush.bf16.msra.mxu0 0
  %209 = vmatpush.bf16.msra.mxu0 %v200
  %210 = vmatmul.bf16.gmra.mxu0 %v196
  %v211 = vpop.f32.mrf.mxu0
  %v212 = vadd.f32 %v191, %v211
  %v213 = vpop.f32.mrf.mxu0
  %214 = vdwg.mxu0
  %v215 = vld [vmem:[%s4] sm:$0x1]
  %v217 = vperm.slane %v215, 0
  %v219 = vadd.f32 %v212, %v217
  %v220 = vmax.f32 %v219, 0.0
  %v221 = vpack.c.bf16 %v220, %v220
  %v222 = vld [vmem:[%s5] sm:$0xf]
  %v223 = vld [vmem:[%s5 + $0x4] sm:$0xf]
  %v224 = vld [vmem:[%s5 + $0x8] sm:$0xf]
  %v225 = vld [vmem:[%s5 + $0xc] sm:$0xf]
  %v226 = vld [vmem:[%s6] sm:$0x1]
  %v228 = vperm.slane %v226, 0
  %v234 = vunpack.c.l.b16 %v222
  %v235 = vunpack.c.l.b16 %v223
  %v236 = vunpack.c.l.b16 %v224
  %v237 = vunpack.c.l.b16 %v225
  %v238 = vpack.c.b16 %v235, %v234
  %v239 = vpack.c.b16 %v237, %v236
  %vm242 = vcmask 261120
  %v244 = vsel %vm242, %v221, 0
  %246 = vmatpush.bf16.msra.mxu0 0
  %247 = vmatpush.bf16.msra.mxu0 0
  %248 = vmatpush.bf16.msra.mxu0 0
  %249 = vmatpush.bf16.msra.mxu0 0
  %250 = vmatpush.bf16.msra.mxu0 0
  %251 = vmatpush.bf16.msra.mxu0 0
  %252 = vmatpush.bf16.msra.mxu0 %v239
  %253 = vmatpush.bf16.msra.mxu0 %v238
  %254 = vmatmul.bf16.gmra.mxu0 %v244
  %v255 = vpop.f32.mrf.mxu0
  %v256 = vadd.f32 %v228, %v255
  %v257 = vpop.f32.mrf.mxu0
  %258 = vdwg.mxu0
  %v259 = vmax.f32 %v256, 0.0
  %v260 = vpack.c.bf16 %v259, %v259
  %v261 = vld [vmem:[%s7] sm:$0xf]
  %v262 = vld [vmem:[%s7 + $0x4] sm:$0xf]
  %v263 = vld [vmem:[%s7 + $0x8] sm:$0xf]
  %v264 = vld [vmem:[%s7 + $0xc] sm:$0xf]
  %v265 = vld [vmem:[%s8] sm:$0x1]
  %v267 = vperm.slane %v265, 0
  %v273 = vunpack.c.l.b16 %v261
  %v274 = vunpack.c.l.b16 %v262
  %v275 = vunpack.c.l.b16 %v263
  %v276 = vunpack.c.l.b16 %v264
  %v277 = vpack.c.b16 %v274, %v273
  %v278 = vpack.c.b16 %v276, %v275
  %v282 = vsel %vm242, %v260, 0
  %284 = vmatpush.bf16.msra.mxu0 0
  %285 = vmatpush.bf16.msra.mxu0 0
  %286 = vmatpush.bf16.msra.mxu0 0
  %287 = vmatpush.bf16.msra.mxu0 0
  %288 = vmatpush.bf16.msra.mxu0 0
  %289 = vmatpush.bf16.msra.mxu0 0
  %290 = vmatpush.bf16.msra.mxu0 %v278
  %291 = vmatpush.bf16.msra.mxu0 %v277
  %292 = vmatmul.bf16.gmra.mxu0 %v282
  %v293 = vpop.f32.mrf.mxu0
  %v294 = vadd.f32 %v267, %v293
  %v295 = vpop.f32.mrf.mxu0
  %296 = vdwg.mxu0
  %v297 = vpack.c.bf16 %v294, %v294
  %298 = vst [vmem:[%s9] sm:$0xf] %v297
  // Predicated region
  $region38: #{discriminator_forward.1} parent=0 // pred_check
    _
  $region39: #{discriminator_forward.1} parent=0 // pred_check_branch
    %300 = sbr.rel (0) target = $region41
  $region40: #{discriminator_forward.1} parent=0 // pred_region
    _
  $region41: #{discriminator_forward.1} parent=0 // pred_fallthru
    _
  // Predicated region
  $region42: #{discriminator_forward.1} parent=0 // pred_check
    _
  $region43: #{discriminator_forward.1} parent=0 // pred_check_branch
    %302 = sbr.rel (0) target = $region45
  $region44: #{discriminator_forward.1} parent=0 // pred_region
    _
  $region45: #{discriminator_forward.1} parent=0 // pred_fallthru
    _

</llo_original>
